<compile_context>
chip_gen: v7x
topology: tpu7x:2x2x1
jax: 0.10.0
libtpu: 0.0.40
codegen_flags: <defaults>
</compile_context>

<pallas_src>
import math

import jax
import jax.numpy as jnp
from jax import lax
from jax.experimental import pallas as pl
from jax.experimental.pallas import tpu as pltpu

LANE = 128            # TPU lane width; batch tiles aligned to this.
SUBLANE = 8           # sublane granule; hidden feature dims padded to this.
MAX_TILE_B = 8192     # batch slab cap (rows); ~8 MiB VMEM worst case here.
SPLIT_THRESHOLD = 4096  # force >=2 grid steps above this many rows (v7x 2 TCs).


def _gelu_exact(x):
    # PyTorch nn.GELU() default: 0.5 * x * (1 + erf(x / sqrt(2)))
    return 0.5 * x * (1.0 + lax.erf(x * (1.0 / math.sqrt(2.0))))


def _round_up(n, m):
    return pl.cdiv(n, m) * m


def fc_nn_kernel(xt_ref, w1t_ref, b1_ref, w2t_ref, b2_ref, w3t_ref, b3_ref, o_ref):
    xt = xt_ref[...]                                            # (L, TB)   f32
    # Layer 1: (H1p, L) @ (L, TB) -> (H1p, TB), bias broadcast along lanes.
    h1 = jnp.dot(w1t_ref[...], xt, preferred_element_type=jnp.float32) + b1_ref[...]
    h1 = _gelu_exact(h1)                                        # (H1p, TB)
    # Layer 2: (H2p, H1p) @ (H1p, TB) -> (H2p, TB)
    h2 = jnp.dot(w2t_ref[...], h1, preferred_element_type=jnp.float32) + b2_ref[...]
    h2 = _gelu_exact(h2)                                        # (H2p, TB)
    # Layer 3: (1, H2p) @ (H2p, TB) -> (1, TB); lane-dense output row.
    out = jnp.dot(w3t_ref[...], h2, preferred_element_type=jnp.float32) + b3_ref[0, 0]
    o_ref[...] = out.astype(o_ref.dtype)                        # (1, TB)


def _pad2(a, rows, cols):
    return jnp.zeros((rows, cols), jnp.float32).at[: a.shape[0], : a.shape[1]].set(a)


def fc_nn_forward(x, params, *, max_tile_b=MAX_TILE_B):
    """x: (B, L) float32.  params: dict of (w1,b1,w2,b2,w3,b3) un-padded."""
    B, L = x.shape
    H1 = params["w1"].shape[1]
    H2 = params["w2"].shape[1]

    # Hidden dims padded only to the sublane granule (exact: pad rows/cols 0).
    H1p = max(SUBLANE, _round_up(H1, SUBLANE))
    H2p = max(SUBLANE, _round_up(H2, SUBLANE))

    # Balanced batch tiling on the lane axis (128-aligned tiles):
    #   * large slabs amortize per-grid-step overhead,
    #   * balanced tiles avoid padding a near-full extra tile for awkward B,
    #   * >=2 tiles for big B so v7x can shard the grid across both TCs.
    B128 = _round_up(B, LANE)
    num_tiles = pl.cdiv(B128, max_tile_b)
    if B128 >= SPLIT_THRESHOLD:
        num_tiles = max(num_tiles, 2)
    tile_b = _round_up(pl.cdiv(B128, num_tiles), LANE)
    Bp = num_tiles * tile_b

    # Transposed, padded input: (L, Bp).  The transpose fuses with the pad
    # copy in the wrapper; inside the kernel the x block is lane-dense.
    xt = jnp.zeros((L, Bp), jnp.float32).at[:, :B].set(x.T)

    # Resident (transposed) weight tiles, compact-padded.
    w1t = _pad2(params["w1"].T, H1p, L)                  # (H1p, L)
    b1 = _pad2(params["b1"][:, None], H1p, 1)            # (H1p, 1)
    w2t = _pad2(params["w2"].T, H2p, H1p)                # (H2p, H1p)
    b2 = _pad2(params["b2"][:, None], H2p, 1)            # (H2p, 1)
    w3t = _pad2(params["w3"].T, 1, H2p)                  # (1,   H2p)
    b3 = params["b3"].reshape(1, 1).astype(jnp.float32)  # (1, 1) scalar -> SMEM

    full = lambda i: (0, 0)

    cost = pl.CostEstimate(
        flops=int(2 * Bp * (L * H1p + H1p * H2p + H2p)),
        transcendentals=int(Bp * (H1p + H2p)),
        bytes_accessed=int(
            4 * (Bp * L + H1p * L + H1p + H2p * H1p + H2p + H2p + 1 + Bp)
        ),
    )

    out_padded = pl.pallas_call(
        fc_nn_kernel,
        out_shape=jax.ShapeDtypeStruct((1, Bp), jnp.float32),
        grid_spec=pltpu.PrefetchScalarGridSpec(
            num_scalar_prefetch=0,
            grid=(num_tiles,),
            in_specs=[
                pl.BlockSpec((L, tile_b), lambda i: (0, i)),    # x slab (streamed)
                pl.BlockSpec((H1p, L), full),                   # w1^T (resident)
                pl.BlockSpec((H1p, 1), full),                   # b1
                pl.BlockSpec((H2p, H1p), full),                 # w2^T (resident)
                pl.BlockSpec((H2p, 1), full),                   # b2
                pl.BlockSpec((1, H2p), full),                   # w3^T (resident)
                pl.BlockSpec(memory_space=pltpu.MemorySpace.SMEM),  # b3 scalar
            ],
            # Lane-dense output: one (1, tile_b) row per grid step.
            out_specs=pl.BlockSpec((1, tile_b), lambda i: (0, i)),
        ),
        compiler_params=pltpu.CompilerParams(
            dimension_semantics=("parallel",),
            vmem_limit_bytes=32 * 1024 * 1024,
        ),
        cost_estimate=cost,
    )(xt, w1t, b1, w2t, b2, w3t, b3)

    return out_padded[0, :B][:, None]                    # (B, 1)


def init_params(key, L, h=(18, 12)):
    """Deterministic init mimicking nn.Linear default (U[-1/sqrt(fan_in), +])."""
    sizes = [L] + list(h) + [1]
    params = {}
    for k in range(len(sizes) - 1):
        fan_in, fan_out = sizes[k], sizes[k + 1]
        key, kw, kb = jax.random.split(key, 3)
        bound = 1.0 / math.sqrt(fan_in)
        params[f"w{k+1}"] = jax.random.uniform(
            kw, (fan_in, fan_out), jnp.float32, -bound, bound
        )
        params[f"b{k+1}"] = jax.random.uniform(
            kb, (fan_out,), jnp.float32, -bound, bound
        )
    return params


def fc_nn_reference(x, params):
    h1 = _gelu_exact(x @ params["w1"] + params["b1"])
    h2 = _gelu_exact(h1 @ params["w2"] + params["b2"])
    return h2 @ params["w3"] + params["b3"]


if __name__ == "__main__":
    key = jax.random.PRNGKey(0)
    L = 16          # number of input features
    B = 8           # batch size
    kx, kp = jax.random.split(key)
    x = jax.random.normal(kx, (B, L), jnp.float32)
    params = init_params(kp, L, h=(18, 12))

    out = jax.block_until_ready(fc_nn_forward(x, params))
    ref = fc_nn_reference(x, params)

    assert out.shape == (B, 1), out.shape
    assert jnp.allclose(out, ref, atol=1e-5, rtol=1e-5), (
        float(jnp.max(jnp.abs(out - ref)))
    )
    print("KERNEL_OK")
</pallas_src>

<mosaic_0001>
module attributes {stable_mosaic.version = 11 : i64} {
  func.func @fc_nn_kernel(%arg0: i32, %arg1: memref<16x128xf32, #tpu.memory_space<vmem>>, %arg2: memref<24x16xf32, #tpu.memory_space<vmem>>, %arg3: memref<24x1xf32, #tpu.memory_space<vmem>>, %arg4: memref<16x24xf32, #tpu.memory_space<vmem>>, %arg5: memref<16x1xf32, #tpu.memory_space<vmem>>, %arg6: memref<1x16xf32, #tpu.memory_space<vmem>>, %arg7: memref<1x1xf32, #tpu.memory_space<smem>>, %arg8: memref<1x128xf32, #tpu.memory_space<vmem>>) attributes {dimension_semantics = [#tpu.dimension_semantics<parallel>], iteration_bounds = array<i64: 1>, scalar_prefetch = 0 : i64, scratch_operands = 0 : i64, tpu.core_type = #tpu.core_type<tc>, window_params = [{transform_indices = @transform_0, window_bounds = array<i64: 16, 128>}, {pipeline_mode = #tpu.pipeline_mode<synchronous>, transform_indices = @transform_1, window_bounds = array<i64: 24, 16>}, {pipeline_mode = #tpu.pipeline_mode<synchronous>, transform_indices = @transform_2, window_bounds = array<i64: 24, 1>}, {pipeline_mode = #tpu.pipeline_mode<synchronous>, transform_indices = @transform_3, window_bounds = array<i64: 16, 24>}, {pipeline_mode = #tpu.pipeline_mode<synchronous>, transform_indices = @transform_4, window_bounds = array<i64: 16, 1>}, {pipeline_mode = #tpu.pipeline_mode<synchronous>, transform_indices = @transform_5, window_bounds = array<i64: 1, 16>}, {transform_indices = @transform_6, window_bounds = array<i64: 1, 1>}, {transform_indices = @transform_7, window_bounds = array<i64: 1, 128>}]} {
    %c0 = arith.constant 0 : index
    %c0_0 = arith.constant 0 : index
    %0 = vector.load %arg1[%c0, %c0_0] : memref<16x128xf32, #tpu.memory_space<vmem>>, vector<16x128xf32>
    %c0_1 = arith.constant 0 : index
    %c0_2 = arith.constant 0 : index
    %1 = vector.load %arg2[%c0_1, %c0_2] : memref<24x16xf32, #tpu.memory_space<vmem>>, vector<24x16xf32>
    %cst = arith.constant dense<0.000000e+00> : vector<24x128xf32>
    %2 = tpu.matmul %1, %0, %cst {dimension_numbers = #tpu.dot_dimension_numbers<[1], [0], [0], [1], [0, 0, 1, 1], [], []>} : vector<24x16xf32>, vector<16x128xf32>, vector<24x128xf32> -> vector<24x128xf32>
    %c0_3 = arith.constant 0 : index
    %c0_4 = arith.constant 0 : index
    %3 = vector.load %arg3[%c0_3, %c0_4] : memref<24x1xf32, #tpu.memory_space<vmem>>, vector<24x1xf32>
    %4 = vector.broadcast %3 : vector<24x1xf32> to vector<24x128xf32>
    %5 = arith.addf %2, %4 : vector<24x128xf32>
    %cst_5 = arith.constant 5.000000e-01 : f32
    %6 = vector.broadcast %cst_5 : f32 to vector<24x128xf32>
    %7 = arith.mulf %6, %5 : vector<24x128xf32>
    %cst_6 = arith.constant 0.707106769 : f32
    %8 = vector.broadcast %cst_6 : f32 to vector<24x128xf32>
    %9 = arith.mulf %5, %8 : vector<24x128xf32>
    %10 = math.erf %9 : vector<24x128xf32>
    %cst_7 = arith.constant 1.000000e+00 : f32
    %11 = vector.broadcast %cst_7 : f32 to vector<24x128xf32>
    %12 = arith.addf %11, %10 : vector<24x128xf32>
    %13 = arith.mulf %7, %12 : vector<24x128xf32>
    %c0_8 = arith.constant 0 : index
    %c0_9 = arith.constant 0 : index
    %14 = vector.load %arg4[%c0_8, %c0_9] : memref<16x24xf32, #tpu.memory_space<vmem>>, vector<16x24xf32>
    %cst_10 = arith.constant dense<0.000000e+00> : vector<16x128xf32>
    %15 = tpu.matmul %14, %13, %cst_10 {dimension_numbers = #tpu.dot_dimension_numbers<[1], [0], [0], [1], [0, 0, 1, 1], [], []>} : vector<16x24xf32>, vector<24x128xf32>, vector<16x128xf32> -> vector<16x128xf32>
    %c0_11 = arith.constant 0 : index
    %c0_12 = arith.constant 0 : index
    %16 = vector.load %arg5[%c0_11, %c0_12] : memref<16x1xf32, #tpu.memory_space<vmem>>, vector<16x1xf32>
    %17 = vector.broadcast %16 : vector<16x1xf32> to vector<16x128xf32>
    %18 = arith.addf %15, %17 : vector<16x128xf32>
    %cst_13 = arith.constant 5.000000e-01 : f32
    %19 = vector.broadcast %cst_13 : f32 to vector<16x128xf32>
    %20 = arith.mulf %19, %18 : vector<16x128xf32>
    %cst_14 = arith.constant 0.707106769 : f32
    %21 = vector.broadcast %cst_14 : f32 to vector<16x128xf32>
    %22 = arith.mulf %18, %21 : vector<16x128xf32>
    %23 = math.erf %22 : vector<16x128xf32>
    %cst_15 = arith.constant 1.000000e+00 : f32
    %24 = vector.broadcast %cst_15 : f32 to vector<16x128xf32>
    %25 = arith.addf %24, %23 : vector<16x128xf32>
    %26 = arith.mulf %20, %25 : vector<16x128xf32>
    %c0_16 = arith.constant 0 : index
    %c0_17 = arith.constant 0 : index
    %27 = vector.load %arg6[%c0_16, %c0_17] : memref<1x16xf32, #tpu.memory_space<vmem>>, vector<1x16xf32>
    %cst_18 = arith.constant dense<0.000000e+00> : vector<1x128xf32>
    %28 = tpu.matmul %27, %26, %cst_18 {dimension_numbers = #tpu.dot_dimension_numbers<[1], [0], [0], [1], [0, 0, 1, 1], [], []>} : vector<1x16xf32>, vector<16x128xf32>, vector<1x128xf32> -> vector<1x128xf32>
    %c0_19 = arith.constant 0 : index
    %c0_20 = arith.constant 0 : index
    %29 = memref.load %arg7[%c0_19, %c0_20] : memref<1x1xf32, #tpu.memory_space<smem>>
    %30 = vector.broadcast %29 : f32 to vector<1x128xf32>
    %31 = arith.addf %28, %30 : vector<1x128xf32>
    %c0_21 = arith.constant 0 : index
    %c0_22 = arith.constant 0 : index
    %32 = vector.load %arg8[%c0_21, %c0_22] : memref<1x128xf32, #tpu.memory_space<vmem>>, vector<1x128xf32>
    tpu.vector_store %arg8[%c0_21, %c0_22], %31 {strides = array<i32>} : memref<1x128xf32, #tpu.memory_space<vmem>>, vector<1x128xf32>,
    return
  }
  func.func @transform_0(%arg0: i32) -> (i32, i32) {
    %c0_i32 = arith.constant 0 : i32
    %c0_i32_0 = arith.constant 0 : i32
    return %c0_i32, %arg0 : i32, i32
  }
  func.func @transform_1(%arg0: i32) -> (i32, i32) {
    %c0_i32 = arith.constant 0 : i32
    %c0_i32_0 = arith.constant 0 : i32
    %c0_i32_1 = arith.constant 0 : i32
    return %c0_i32, %c0_i32_0 : i32, i32
  }
  func.func @transform_2(%arg0: i32) -> (i32, i32) {
    %c0_i32 = arith.constant 0 : i32
    %c0_i32_0 = arith.constant 0 : i32
    %c0_i32_1 = arith.constant 0 : i32
    return %c0_i32, %c0_i32_0 : i32, i32
  }
  func.func @transform_3(%arg0: i32) -> (i32, i32) {
    %c0_i32 = arith.constant 0 : i32
    %c0_i32_0 = arith.constant 0 : i32
    %c0_i32_1 = arith.constant 0 : i32
    return %c0_i32, %c0_i32_0 : i32, i32
  }
  func.func @transform_4(%arg0: i32) -> (i32, i32) {
    %c0_i32 = arith.constant 0 : i32
    %c0_i32_0 = arith.constant 0 : i32
    %c0_i32_1 = arith.constant 0 : i32
    return %c0_i32, %c0_i32_0 : i32, i32
  }
  func.func @transform_5(%arg0: i32) -> (i32, i32) {
    %c0_i32 = arith.constant 0 : i32
    %c0_i32_0 = arith.constant 0 : i32
    %c0_i32_1 = arith.constant 0 : i32
    return %c0_i32, %c0_i32_0 : i32, i32
  }
  func.func @transform_6(%arg0: i32) -> (i32, i32) {
    %c0_i32 = arith.constant 0 : i32
    %c0_i32_0 = arith.constant 0 : i32
    %c0_i32_1 = arith.constant 0 : i32
    return %c0_i32, %c0_i32_0 : i32, i32
  }
  func.func @transform_7(%arg0: i32) -> (i32, i32) {
    %c0_i32 = arith.constant 0 : i32
    %c0_i32_0 = arith.constant 0 : i32
    return %c0_i32, %arg0 : i32, i32
  }
}

</mosaic_0001>

<llo_original>
// kernel: tpu_custom_call.1
$region0: #{tpu_custom_call.1}
  #allocation0 [shape = 'u32[]', space=smem, size = 0x4, offset = 0x4, fixed_abs, tag = 'smem constant byte address 0x4 - core index']
  #allocation1 [shape = 'u32[144,128]{1,0:T(1,128)}', space=vmem, size = 0x12000, scoped, tag = 'internal scratch']
  #allocation2 [shape = 'f32[1,1]{1,0:T(1,128)S(6)}', space=smem, size = 0x200, scoped, tag = 'scoped memory for tpu_custom_call.1']
  %s0 = inlined_call_operand.vmem [shape: f32[16,128], index: 0, kind: input, shape index: {}]
  %s1 = inlined_call_operand.vmem [shape: f32[24,16], index: 1, kind: input, shape index: {}]
  %s2 = inlined_call_operand.vmem [shape: f32[24,1], index: 2, kind: input, shape index: {}]
  %s3 = inlined_call_operand.vmem [shape: f32[16,24], index: 3, kind: input, shape index: {}]
  %s4 = inlined_call_operand.vmem [shape: f32[16,1], index: 4, kind: input, shape index: {}]
  %s5 = inlined_call_operand.vmem [shape: f32[1,16], index: 5, kind: input, shape index: {}]
  %s6 = inlined_call_operand.<no memory space> [shape: f32[1,1], index: 6, kind: input, shape index: {}]
  %s7 = inlined_call_operand.hbm [shape: f32[1,128], index: 7, kind: output, shape index: {}]
  %s8 = sld [smem:[#allocation0]]
  $region38: #{tpu_custom_call.1} parent=0
    _
  %s10 = ssub.s32 1, %s8
  %s11 = scalar_select 0, %s10, %s8
  %12 = sst [smem:[#allocation2]] %s6
  $region1: #{tpu_custom_call.1} parent=0
    #allocation3 [shape = 'u8[512]{0}', space=vmem, size = 0x400, scoped, tag = 'output window, operand 0, single buffered']
    #allocation4 [shape = 's32[1]{0}', space=sflag, size = 0x4, scoped, tag = 'scoped memory for tpu_custom_call.1']
    %13 = vsyncpa [#allocation4], 0
    // Predicated region
    $region2: #{tpu_custom_call.1} parent=1 // pred_check
      _
    $region3: #{tpu_custom_call.1} parent=1 // pred_check_branch
      %15 = sbr.rel (0) target = $region5
    $region4: #{tpu_custom_call.1} parent=1 // pred_region
      _
    $region5: #{tpu_custom_call.1} parent=1 // pred_fallthru
      _
    // Predicated region
    $region6: #{tpu_custom_call.1} parent=1 // pred_check
      _
    $region7: #{tpu_custom_call.1} parent=1 // pred_check_branch
      %17 = sbr.rel (0) target = $region9
    $region8: #{tpu_custom_call.1} parent=1 // pred_region
      _
    $region9: #{tpu_custom_call.1} parent=1 // pred_fallthru
      _
    // Predicated region
    $region10: #{tpu_custom_call.1} parent=1 // pred_check
      _
    $region11: #{tpu_custom_call.1} parent=1 // pred_check_branch
      %19 = sbr.rel (0) target = $region13
    $region12: #{tpu_custom_call.1} parent=1 // pred_region
      _
    $region13: #{tpu_custom_call.1} parent=1 // pred_fallthru
      _
    // Predicated region
    $region14: #{tpu_custom_call.1} parent=1 // pred_check
      _
    $region15: #{tpu_custom_call.1} parent=1 // pred_check_branch
      %21 = sbr.rel (0) target = $region17
    $region16: #{tpu_custom_call.1} parent=1 // pred_region
      _
    $region17: #{tpu_custom_call.1} parent=1 // pred_fallthru
      _
    // Predicated region
    $region18: #{tpu_custom_call.1} parent=1 // pred_check
      _
    $region19: #{tpu_custom_call.1} parent=1 // pred_check_branch
      %23 = sbr.rel (0) target = $region21
    $region20: #{tpu_custom_call.1} parent=1 // pred_region
      _
    $region21: #{tpu_custom_call.1} parent=1 // pred_fallthru
      _
    // Predicated region
    $region22: #{tpu_custom_call.1} parent=1 // pred_check
      _
    $region23: #{tpu_custom_call.1} parent=1 // pred_check_branch
      %25 = sbr.rel (0) target = $region25
    $region24: #{tpu_custom_call.1} parent=1 // pred_region
      _
    $region25: #{tpu_custom_call.1} parent=1 // pred_fallthru
      _
    // Predicated region
    $region26: #{tpu_custom_call.1} parent=1 // pred_check
      _
    $region27: #{tpu_custom_call.1} parent=1 // pred_check_branch
      %27 = sbr.rel (0) target = $region29
    $region28: #{tpu_custom_call.1} parent=1 // pred_region
      _
    $region29: #{tpu_custom_call.1} parent=1 // pred_fallthru
      _
    %v28 = vld [vmem:[%s0] sm:$0xff]
    %v29 = vld [vmem:[%s0 + $0x8] sm:$0xff]
    %v30 = vld [vmem:[%s1] sm:$0xff]
    %v31 = vld [vmem:[%s1 + $0x8] sm:$0xff]
    %v32 = vld [vmem:[%s1 + $0x10] sm:$0xff]
    %v33 = vld [vmem:[%s2] sm:$0xff]
    %v34 = vld [vmem:[%s2 + $0x8] sm:$0xff]
    %v35 = vld [vmem:[%s2 + $0x10] sm:$0xff]
    %37 = vset.pattern.permute.xlu0 0
    %38 = vperm.xlu0 %37, %v33
    %v39 = vpop.permute.xlu0 %38
    %42 = vset.pattern.permute.xlu0 0
    %43 = vperm.xlu0 %42, %v34
    %v44 = vpop.permute.xlu0 %43
    %47 = vset.pattern.permute.xlu0 0
    %48 = vperm.xlu0 %47, %v35
    %v49 = vpop.permute.xlu0 %48
    %vm51 = vcmask 130048
    %v53 = vsel %vm51, %v30, 0
    %v56 = vsel %vm51, %v31, 0
    %v59 = vsel %vm51, %v32, 0
    %61 = vmatprep.subr.mxu0 0.0
    %62 = vmatpush1.msra.mxu0 %v28
    %63 = vmatprep.subr.mxu0 0.0
    %64 = vmatpush1.msra.mxu0 %v29
    %65 = vmatprep.subr.mxu0 0.0
    %66 = vmatpush1.msra.mxu0 0.0
    %67 = vmatprep.subr.mxu0 0.0
    %68 = vmatpush1.msra.mxu0 0.0
    %69 = vmatprep.subr.mxu0 0.0
    %70 = vmatpush1.msra.mxu0 0.0
    %71 = vmatprep.subr.mxu0 0.0
    %72 = vmatpush1.msra.mxu0 0.0
    %73 = vmatprep.subr.mxu0 0.0
    %74 = vmatpush1.msra.mxu0 0.0
    %75 = vmatprep.subr.mxu0 0.0
    %76 = vmatpush1.msra.mxu0 0.0
    %77 = vmatprep.subr.mxu0 0.0
    %78 = vmatpush1.msra.mxu0 0.0
    %79 = vmatprep.subr.mxu0 0.0
    %80 = vmatpush1.msra.mxu0 0.0
    %81 = vmatprep.subr.mxu0 0.0
    %82 = vmatpush1.msra.mxu0 0.0
    %83 = vmatprep.subr.mxu0 0.0
    %84 = vmatpush1.msra.mxu0 0.0
    %85 = vmatprep.subr.mxu0 0.0
    %86 = vmatpush1.msra.mxu0 0.0
    %87 = vmatprep.subr.mxu0 0.0
    %88 = vmatpush1.msra.mxu0 0.0
    %89 = vmatprep.subr.mxu0 0.0
    %90 = vmatpush1.msra.mxu0 0.0
    %91 = vmatprep.subr.mxu0 0.0
    %92 = vmatpush1.msra.mxu0 0.0
    %93 = vmatprep.subr.mxu0 0.0
    %94 = vmatpush1.msra.mxu0 0.0
    %95 = vmatprep.subr.mxu0 0.0
    %96 = vmatpush1.msra.mxu0 0.0
    %97 = vmatprep.subr.mxu0 0.0
    %98 = vmatpush1.msra.mxu0 0.0
    %99 = vmatprep.subr.mxu0 0.0
    %100 = vmatpush1.msra.mxu0 0.0
    %101 = vmatprep.subr.mxu0 0.0
    %102 = vmatpush1.msra.mxu0 0.0
    %103 = vmatprep.subr.mxu0 0.0
    %104 = vmatpush1.msra.mxu0 0.0
    %105 = vmatprep.subr.mxu0 0.0
    %106 = vmatpush1.msra.mxu0 0.0
    %107 = vmatprep.subr.mxu0 0.0
    %108 = vmatpush1.msra.mxu0 0.0
    %109 = vmatprep.subr.mxu0 0.0
    %110 = vmatpush1.msra.mxu0 0.0
    %111 = vmatprep.subr.mxu0 0.0
    %112 = vmatpush1.msra.mxu0 0.0
    %113 = vmatprep.subr.mxu0 0.0
    %114 = vmatpush1.msra.mxu0 0.0
    %115 = vmatprep.subr.mxu0 0.0
    %116 = vmatpush1.msra.mxu0 0.0
    %117 = vmatprep.subr.mxu0 0.0
    %118 = vmatpush1.msra.mxu0 0.0
    %119 = vmatprep.subr.mxu0 0.0
    %120 = vmatpush1.msra.mxu0 0.0
    %121 = vmatprep.subr.mxu0 0.0
    %122 = vmatpush1.msra.mxu0 0.0
    %123 = vmatprep.subr.mxu0 0.0
    %124 = vmatpush1.msra.mxu0 0.0
    %125 = vmatprep.mubr.f32.mxu0 0.0
    %126 = vmatmul.mubr.f32.gmra.mrb[0].mxu0 %v53
    %v127 = vpop.f32.mrb[0].mxu0
    %v128 = vadd.f32 %v39, %v127
    %v129 = vpop.f32.mrb[0].mxu0
    %130 = vmatprep.mubr.f32.mxu0 0.0
    %131 = vmatmul.mubr.f32.gmra.mrb[0].mxu0 %v56
    %v132 = vpop.f32.mrb[0].mxu0
    %v133 = vadd.f32 %v44, %v132
    %v134 = vpop.f32.mrb[0].mxu0
    %135 = vmatprep.mubr.f32.mxu0 0.0
    %136 = vmatmul.mubr.f32.gmra.mrb[0].mxu0 %v59
    %v137 = vpop.f32.mrb[0].mxu0
    %v138 = vadd.f32 %v49, %v137
    %v139 = vpop.f32.mrb[0].mxu0
    %140 = vdwg.mxu0
    %v141 = vmul.f32 %v128, 0.5
    %v142 = vmul.f32 %v133, 0.5
    %v143 = vmul.f32 %v138, 0.5
    %v144 = vmul.f32 %v128, 0.70710677
    %v145 = vmul.f32 %v133, 0.70710677
    %v146 = vmul.f32 %v138, 0.70710677
    %v147 = verf.f32.pop %v144
    %v148 = verf.f32.pop %v145
    %v149 = verf.f32.pop %v146
    %v150 = vadd.f32 %v147, 1.0
    %v151 = vadd.f32 %v148, 1.0
    %v152 = vadd.f32 %v149, 1.0
    %v153 = vmul.f32 %v141, %v150
    %v154 = vmul.f32 %v142, %v151
    %v155 = vmul.f32 %v143, %v152
    %v156 = vld [vmem:[%s3] sm:$0xff]
    %v157 = vld [vmem:[%s3 + $0x8] sm:$0xff]
    %v158 = vld [vmem:[%s4] sm:$0xff]
    %v159 = vld [vmem:[%s4 + $0x8] sm:$0xff]
    %161 = vset.pattern.permute.xlu0 0
    %162 = vperm.xlu0 %161, %v158
    %v163 = vpop.permute.xlu0 %162
    %166 = vset.pattern.permute.xlu0 0
    %167 = vperm.xlu0 %166, %v159
    %v168 = vpop.permute.xlu0 %167
    %vm170 = vcmask 195584
    %v172 = vsel %vm170, %v156, 0
    %v175 = vsel %vm170, %v157, 0
    %177 = vmatprep.subr.mxu0 0.0
    %178 = vmatpush1.msra.mxu0 %v153
    %179 = vmatprep.subr.mxu0 0.0
    %180 = vmatpush1.msra.mxu0 %v154
    %181 = vmatprep.subr.mxu0 0.0
    %182 = vmatpush1.msra.mxu0 %v155
    %183 = vmatprep.subr.mxu0 0.0
    %184 = vmatpush1.msra.mxu0 0.0
    %185 = vmatprep.subr.mxu0 0.0
    %186 = vmatpush1.msra.mxu0 0.0
    %187 = vmatprep.subr.mxu0 0.0
    %188 = vmatpush1.msra.mxu0 0.0
    %189 = vmatprep.subr.mxu0 0.0
    %190 = vmatpush1.msra.mxu0 0.0
    %191 = vmatprep.subr.mxu0 0.0
    %192 = vmatpush1.msra.mxu0 0.0
    %193 = vmatprep.subr.mxu0 0.0
    %194 = vmatpush1.msra.mxu0 0.0
    %195 = vmatprep.subr.mxu0 0.0
    %196 = vmatpush1.msra.mxu0 0.0
    %197 = vmatprep.subr.mxu0 0.0
    %198 = vmatpush1.msra.mxu0 0.0
    %199 = vmatprep.subr.mxu0 0.0
    %200 = vmatpush1.msra.mxu0 0.0
    %201 = vmatprep.subr.mxu0 0.0
    %202 = vmatpush1.msra.mxu0 0.0
    %203 = vmatprep.subr.mxu0 0.0
    %204 = vmatpush1.msra.mxu0 0.0
    %205 = vmatprep.subr.mxu0 0.0
    %206 = vmatpush1.msra.mxu0 0.0
    %207 = vmatprep.subr.mxu0 0.0
    %208 = vmatpush1.msra.mxu0 0.0
    %209 = vmatprep.subr.mxu0 0.0
    %210 = vmatpush1.msra.mxu0 0.0
    %211 = vmatprep.subr.mxu0 0.0
    %212 = vmatpush1.msra.mxu0 0.0
    %213 = vmatprep.subr.mxu0 0.0
    %214 = vmatpush1.msra.mxu0 0.0
    %215 = vmatprep.subr.mxu0 0.0
    %216 = vmatpush1.msra.mxu0 0.0
    %217 = vmatprep.subr.mxu0 0.0
    %218 = vmatpush1.msra.mxu0 0.0
    %219 = vmatprep.subr.mxu0 0.0
    %220 = vmatpush1.msra.mxu0 0.0
    %221 = vmatprep.subr.mxu0 0.0
    %222 = vmatpush1.msra.mxu0 0.0
    %223 = vmatprep.subr.mxu0 0.0
    %224 = vmatpush1.msra.mxu0 0.0
    %225 = vmatprep.subr.mxu0 0.0
    %226 = vmatpush1.msra.mxu0 0.0
    %227 = vmatprep.subr.mxu0 0.0
    %228 = vmatpush1.msra.mxu0 0.0
    %229 = vmatprep.subr.mxu0 0.0
    %230 = vmatpush1.msra.mxu0 0.0
    %231 = vmatprep.subr.mxu0 0.0
    %232 = vmatpush1.msra.mxu0 0.0
    %233 = vmatprep.subr.mxu0 0.0
    %234 = vmatpush1.msra.mxu0 0.0
    %235 = vmatprep.subr.mxu0 0.0
    %236 = vmatpush1.msra.mxu0 0.0
    %237 = vmatprep.subr.mxu0 0.0
    %238 = vmatpush1.msra.mxu0 0.0
    %239 = vmatprep.subr.mxu0 0.0
    %240 = vmatpush1.msra.mxu0 0.0
    %241 = vmatprep.mubr.f32.mxu0 0.0
    %242 = vmatmul.mubr.f32.gmra.mrb[0].mxu0 %v172
    %v243 = vpop.f32.mrb[0].mxu0
    %v244 = vadd.f32 %v163, %v243
    %v245 = vpop.f32.mrb[0].mxu0
    %246 = vmatprep.mubr.f32.mxu0 0.0
    %247 = vmatmul.mubr.f32.gmra.mrb[0].mxu0 %v175
    %v248 = vpop.f32.mrb[0].mxu0
    %v249 = vadd.f32 %v168, %v248
    %v250 = vpop.f32.mrb[0].mxu0
    %251 = vdwg.mxu0
    %v252 = vmul.f32 %v244, 0.5
    %v253 = vmul.f32 %v249, 0.5
    %v254 = vmul.f32 %v244, 0.70710677
    %v255 = vmul.f32 %v249, 0.70710677
    %v256 = verf.f32.pop %v254
    %v257 = verf.f32.pop %v255
    %v258 = vadd.f32 %v256, 1.0
    %v259 = vadd.f32 %v257, 1.0
    %v260 = vmul.f32 %v252, %v258
    %v261 = vmul.f32 %v253, %v259
    %v262 = vld [vmem:[%s5] sm:$0x1]
    %s263 = sld [smem:[#allocation2]]
    %v264 = vstv %s263
    %v266 = vsel %vm51, %v262, 0
    %268 = vmatprep.subr.mxu0 0.0
    %269 = vmatpush1.msra.mxu0 %v260
    %270 = vmatprep.subr.mxu0 0.0
    %271 = vmatpush1.msra.mxu0 %v261
    %272 = vmatprep.subr.mxu0 0.0
    %273 = vmatpush1.msra.mxu0 0.0
    %274 = vmatprep.subr.mxu0 0.0
    %275 = vmatpush1.msra.mxu0 0.0
    %276 = vmatprep.subr.mxu0 0.0
    %277 = vmatpush1.msra.mxu0 0.0
    %278 = vmatprep.subr.mxu0 0.0
    %279 = vmatpush1.msra.mxu0 0.0
    %280 = vmatprep.subr.mxu0 0.0
    %281 = vmatpush1.msra.mxu0 0.0
    %282 = vmatprep.subr.mxu0 0.0
    %283 = vmatpush1.msra.mxu0 0.0
    %284 = vmatprep.subr.mxu0 0.0
    %285 = vmatpush1.msra.mxu0 0.0
    %286 = vmatprep.subr.mxu0 0.0
    %287 = vmatpush1.msra.mxu0 0.0
    %288 = vmatprep.subr.mxu0 0.0
    %289 = vmatpush1.msra.mxu0 0.0
    %290 = vmatprep.subr.mxu0 0.0
    %291 = vmatpush1.msra.mxu0 0.0
    %292 = vmatprep.subr.mxu0 0.0
    %293 = vmatpush1.msra.mxu0 0.0
    %294 = vmatprep.subr.mxu0 0.0
    %295 = vmatpush1.msra.mxu0 0.0
    %296 = vmatprep.subr.mxu0 0.0
    %297 = vmatpush1.msra.mxu0 0.0
    %298 = vmatprep.subr.mxu0 0.0
    %299 = vmatpush1.msra.mxu0 0.0
    %300 = vmatprep.subr.mxu0 0.0
    %301 = vmatpush1.msra.mxu0 0.0
    %302 = vmatprep.subr.mxu0 0.0
    %303 = vmatpush1.msra.mxu0 0.0
    %304 = vmatprep.subr.mxu0 0.0
    %305 = vmatpush1.msra.mxu0 0.0
    %306 = vmatprep.subr.mxu0 0.0
    %307 = vmatpush1.msra.mxu0 0.0
    %308 = vmatprep.subr.mxu0 0.0
    %309 = vmatpush1.msra.mxu0 0.0
    %310 = vmatprep.subr.mxu0 0.0
    %311 = vmatpush1.msra.mxu0 0.0
    %312 = vmatprep.subr.mxu0 0.0
    %313 = vmatpush1.msra.mxu0 0.0
    %314 = vmatprep.subr.mxu0 0.0
    %315 = vmatpush1.msra.mxu0 0.0
    %316 = vmatprep.subr.mxu0 0.0
    %317 = vmatpush1.msra.mxu0 0.0
    %318 = vmatprep.subr.mxu0 0.0
    %319 = vmatpush1.msra.mxu0 0.0
    %320 = vmatprep.subr.mxu0 0.0
    %321 = vmatpush1.msra.mxu0 0.0
    %322 = vmatprep.subr.mxu0 0.0
    %323 = vmatpush1.msra.mxu0 0.0
    %324 = vmatprep.subr.mxu0 0.0
    %325 = vmatpush1.msra.mxu0 0.0
    %326 = vmatprep.subr.mxu0 0.0
    %327 = vmatpush1.msra.mxu0 0.0
    %328 = vmatprep.subr.mxu0 0.0
    %329 = vmatpush1.msra.mxu0 0.0
    %330 = vmatprep.subr.mxu0 0.0
    %331 = vmatpush1.msra.mxu0 0.0
    %332 = vmatprep.mubr.f32.mxu0 0.0
    %333 = vmatmul.mubr.f32.gmra.mrb[0].mxu0 %v266
    %v334 = vpop.f32.mrb[0].mxu0
    %v335 = vadd.f32 %v264, %v334
    %v336 = vpop.f32.mrb[0].mxu0
    %337 = vdwg.mxu0
    %338 = vst [vmem:[#allocation3] sm:$0x1] %v335
    // Predicated region
    $region30: #{tpu_custom_call.1} parent=1 // pred_check
      _
    $region31: #{tpu_custom_call.1} parent=1 // pred_check_branch
      %340 = sbr.rel (0) target = $region33
    $region32: #{tpu_custom_call.1} parent=1 // pred_region
      %s342 = ssub.s32 16, 16
      %343 = vsyncadd [#allocation4], %s342
      %s345 = sshll.u32 [#allocation3], 4
      %s346 = int_to_ptr.vmem [resolvable:$true] %s345
      %348 = dma.vmem_to_hbm [thread:$0]  %s346, 16, %s7, [#allocation4]
    $region33: #{tpu_custom_call.1} parent=1 // pred_fallthru
      _
    // Predicated region
    $region34: #{tpu_custom_call.1} parent=1 // pred_check
      _
    $region35: #{tpu_custom_call.1} parent=1 // pred_check_branch
      %350 = sbr.rel (0) target = $region37
    $region36: #{tpu_custom_call.1} parent=1 // pred_region
      %351 = dma.done [#allocation4], 16
    $region37: #{tpu_custom_call.1} parent=1 // pred_fallthru
      _
    %352 = vsyncpa [#allocation4], 1

</llo_original>
